<compile_context>
chip_gen: v7x
topology: tpu7x:2x2x1
jax: 0.10.0
libtpu: 0.0.40
codegen_flags: <defaults>
</compile_context>

<pallas_src>
import jax
import jax.numpy as jnp
from jax import lax
from jax.experimental import pallas as pl
from jax.experimental.pallas import tpu as pltpu


_LANES = 512  # lane-dense re-tiled width: multiple of 128 (and even)


def _make_bipolar_kernel(activation):
    def bipolar_kernel(x_ref, o_ref):
        x = x_ref[...]
        c = x.shape[-1]
        # (1, C) sign row: +1 at even columns, -1 at odd.  Column parity inside
        # the block equals global feature parity (C is even, the block spans the
        # full re-tiled width, and the feature dim was padded to even length).
        par = lax.broadcasted_iota(jnp.int32, (1, c), 1) & 1
        sign_row = (1 - 2 * par).astype(x.dtype)
        # Single hoisted broadcast, then two multiplies per block.
        sign = jnp.broadcast_to(sign_row, x.shape)
        o_ref[...] = (activation(x * sign) * sign).astype(o_ref.dtype)

    return bipolar_kernel


def _sublane_packing(dtype):
    """Sublane packing for the dtype: 8 (32-bit), 16 (16-bit), 32 (8-bit)."""
    itemsize = jnp.dtype(dtype).itemsize
    return max(8, 8 * (4 // max(1, itemsize)))


def _pick_row_tile(rows, cols, itemsize, target_block_bytes, sublane):
    """Row tile sized to ~target_block_bytes, rounded to sublane packing."""
    bytes_per_row = cols * itemsize
    tr = max(sublane, target_block_bytes // max(1, bytes_per_row))
    tr = int((tr // sublane) * sublane)
    if tr < rows:
        return tr  # edge block (rows % tr != 0) is handled by Pallas masking
    # Whole array fits in one block; split into two row blocks when possible so
    # both v7x TensorCores get work and per-step overhead is amortized.
    if rows >= 2 * sublane:
        half = -(-rows // 2)                       # cdiv(rows, 2)
        half = -(-half // sublane) * sublane       # round up to sublane
        return int(half)
    return int(rows)  # full-dim block: always a legal block shape


def bipolar(x, activation, *, target_block_bytes=6 * 1024 * 1024,
            donate_input=False):
    """Bipolar activation over the last axis of `x` (any leading dims).

    NOTE: `activation` must be ELEMENTWISE (relu/tanh/elu/...).  The sign trick
    and the flatten-and-retile are only equivalent to the masked reference for
    elementwise activations.
    """
    orig_shape = x.shape
    F = orig_shape[-1]
    lead = 1
    for d in orig_shape[:-1]:
        lead *= d

    # Pad the feature dim to even length so flat-index parity == feature parity.
    if F % 2 != 0:
        x = jnp.pad(x, [(0, 0)] * (x.ndim - 1) + [(0, 1)])
    Fp = x.shape[-1]

    # Flatten and re-tile as (rows, _LANES); pad the tail (sliced off below).
    n = lead * Fp
    cols = _LANES
    n_pad = -(-n // cols) * cols
    xf = x.reshape(-1)
    if n_pad != n:
        xf = jnp.pad(xf, (0, n_pad - n))
    rows = n_pad // cols
    x2d = xf.reshape(rows, cols)

    sublane = _sublane_packing(x2d.dtype)
    tr = _pick_row_tile(rows, cols, x2d.dtype.itemsize, target_block_bytes,
                        sublane)
    grid = (pl.cdiv(rows, tr),)

    out2d = pl.pallas_call(
        _make_bipolar_kernel(activation),
        out_shape=jax.ShapeDtypeStruct((rows, cols), x2d.dtype),
        grid_spec=pltpu.PrefetchScalarGridSpec(
            num_scalar_prefetch=0,
            grid=grid,
            in_specs=[pl.BlockSpec((tr, cols), lambda i: (i, 0))],
            out_specs=pl.BlockSpec((tr, cols), lambda i: (i, 0)),
        ),
        compiler_params=pltpu.CompilerParams(
            dimension_semantics=("parallel",),
            vmem_limit_bytes=32 * 1024 * 1024,
        ),
        input_output_aliases=({0: 0} if donate_input else {}),
    )(x2d)

    out = out2d.reshape(-1)[:n].reshape(lead, Fp)
    if Fp != F:
        out = out[:, :F]
    return out.reshape(orig_shape)


def _reference(x, activation):
    F = x.shape[-1]
    mask = (jnp.arange(F) % 2 == 0).astype(x.dtype)
    pos = activation(x) * mask
    neg = -activation(-x) * (1.0 - mask)
    return pos + neg


if __name__ == "__main__":
    k1, k2 = jax.random.split(jax.random.PRNGKey(0))

    # Case 1: matches the module usage (elementwise ReLU, input_size=256).
    batch, input_size = 16, 256
    relu = lambda v: jnp.maximum(v, 0.0)
    x1 = jax.random.normal(k1, (batch, input_size), dtype=jnp.float32)
    out1 = jax.block_until_ready(bipolar(x1, relu))
    ref1 = _reference(x1, relu)
    assert out1.shape == x1.shape
    assert jnp.allclose(out1, ref1, atol=1e-6, rtol=1e-6), "ReLU case mismatch"

    # Case 2: odd feature dim + leading dims + transcendental activation,
    # exercising the pad / flatten-and-retile path.
    x2 = jax.random.normal(k2, (3, 5, 13), dtype=jnp.float32)
    out2 = jax.block_until_ready(bipolar(x2, jnp.tanh))
    ref2 = _reference(x2, jnp.tanh)
    assert out2.shape == x2.shape
    assert jnp.allclose(out2, ref2, atol=1e-4, rtol=1e-4), "tanh case mismatch"

    print("KERNEL_OK")
</pallas_src>

<mosaic_0001>
module attributes {stable_mosaic.version = 11 : i64} {
  func.func @bipolar_kernel(%arg0: i32, %arg1: memref<8x512xf32, #tpu.memory_space<vmem>>, %arg2: memref<8x512xf32, #tpu.memory_space<vmem>>) attributes {dimension_semantics = [#tpu.dimension_semantics<parallel>], iteration_bounds = array<i64: 1>, scalar_prefetch = 0 : i64, scratch_operands = 0 : i64, tpu.core_type = #tpu.core_type<tc>, window_params = [{transform_indices = @transform_0, window_bounds = array<i64: 8, 512>}, {transform_indices = @transform_1, window_bounds = array<i64: 8, 512>}]} {
    %c0 = arith.constant 0 : index
    %c0_0 = arith.constant 0 : index
    %0 = vector.load %arg1[%c0, %c0_0] : memref<8x512xf32, #tpu.memory_space<vmem>>, vector<8x512xf32>
    %1 = tpu.iota {dimensions = array<i32: 1>} : vector<1x512xi32>
    %c1_i32 = arith.constant 1 : i32
    %2 = vector.broadcast %c1_i32 : i32 to vector<1x512xi32>
    %3 = arith.andi %1, %2 : vector<1x512xi32>
    %c2_i32 = arith.constant 2 : i32
    %4 = vector.broadcast %c2_i32 : i32 to vector<1x512xi32>
    %5 = arith.muli %4, %3 : vector<1x512xi32>
    %c1_i32_1 = arith.constant 1 : i32
    %6 = vector.broadcast %c1_i32_1 : i32 to vector<1x512xi32>
    %7 = arith.subi %6, %5 : vector<1x512xi32>
    %8 = arith.sitofp %7 : vector<1x512xi32> to vector<1x512xf32>
    %9 = vector.shape_cast %8 : vector<1x512xf32> to vector<1x512xf32>
    %10 = vector.broadcast %9 : vector<1x512xf32> to vector<8x512xf32>
    %11 = arith.mulf %0, %10 : vector<8x512xf32>
    %cst = arith.constant 0.000000e+00 : f32
    %12 = vector.broadcast %cst : f32 to vector<8x512xf32>
    %13 = arith.maximumf %11, %12 : vector<8x512xf32>
    %14 = arith.mulf %13, %10 : vector<8x512xf32>
    %c0_2 = arith.constant 0 : index
    %c0_3 = arith.constant 0 : index
    %15 = vector.load %arg2[%c0_2, %c0_3] : memref<8x512xf32, #tpu.memory_space<vmem>>, vector<8x512xf32>
    tpu.vector_store %arg2[%c0_2, %c0_3], %14 {strides = array<i32>} : memref<8x512xf32, #tpu.memory_space<vmem>>, vector<8x512xf32>,
    return
  }
  func.func @transform_0(%arg0: i32) -> (i32, i32) {
    %c0_i32 = arith.constant 0 : i32
    %c0_i32_0 = arith.constant 0 : i32
    return %arg0, %c0_i32 : i32, i32
  }
  func.func @transform_1(%arg0: i32) -> (i32, i32) {
    %c0_i32 = arith.constant 0 : i32
    %c0_i32_0 = arith.constant 0 : i32
    return %arg0, %c0_i32 : i32, i32
  }
}

</mosaic_0001>

<llo_original>
// kernel: tpu_custom_call.1
$region0: #{tpu_custom_call.1}
  #allocation0 [shape = 'u32[]', space=smem, size = 0x4, offset = 0x4, fixed_abs, tag = 'smem constant byte address 0x4 - core index']
  #allocation1 [shape = 'u32[144,128]{1,0:T(1,128)}', space=vmem, size = 0x12000, scoped, tag = 'internal scratch']
  %s0 = inlined_call_operand.hbm [shape: f32[8,512], index: 0, kind: input, shape index: {}]
  %s1 = inlined_call_operand.hbm [shape: f32[8,512], index: 1, kind: output, shape index: {}]
  %s2 = sld [smem:[#allocation0]]
  $region18: #{tpu_custom_call.1} parent=0
    _
  %s4 = ssub.s32 1, %s2
  %s5 = scalar_select 0, %s4, %s2
  $region1: #{tpu_custom_call.1} parent=0
    #allocation2 [shape = 'u8[16384]{0}', space=vmem, size = 0x4000, scoped, tag = 'input window, operand 0, single buffered']
    #allocation3 [shape = 's32[1]{0}', space=sflag, size = 0x4, scoped, tag = 'scoped memory for tpu_custom_call.1']
    #allocation4 [shape = 's32[1]{0}', space=sflag, size = 0x4, scoped, tag = 'scoped memory for tpu_custom_call.1']
    #allocation5 [shape = 'u8[16384]{0}', space=vmem, size = 0x4000, scoped, tag = 'output window, operand 0, single buffered']
    %6 = vsyncpa [#allocation3], 0
    %7 = vsyncpa [#allocation4], 0
    // Predicated region
    $region2: #{tpu_custom_call.1} parent=1 // pred_check
      _
    $region3: #{tpu_custom_call.1} parent=1 // pred_check_branch
      %9 = sbr.rel (0) target = $region5
    $region4: #{tpu_custom_call.1} parent=1 // pred_region
      %s11 = ssub.s32 512, 512
      %12 = vsyncadd [#allocation3], %s11
      %s14 = sshll.u32 [#allocation2], 4
      %s15 = int_to_ptr.vmem [resolvable:$true] %s14
      %17 = dma.hbm_to_vmem [thread:$0]  %s0, 512, %s15, [#allocation3]
    $region5: #{tpu_custom_call.1} parent=1 // pred_fallthru
      _
    // Predicated region
    $region6: #{tpu_custom_call.1} parent=1 // pred_check
      _
    $region7: #{tpu_custom_call.1} parent=1 // pred_check_branch
      %19 = sbr.rel (0) target = $region9
    $region8: #{tpu_custom_call.1} parent=1 // pred_region
      %20 = dma.done [#allocation3], 512
    $region9: #{tpu_custom_call.1} parent=1 // pred_fallthru
      _
    %v21 = vld [vmem:[#allocation2] sm:$0xff]
    %v22 = vld [vmem:[#allocation2 + $0x8] sm:$0xff]
    %v23 = vld [vmem:[#allocation2 + $0x10] sm:$0xff]
    %v24 = vld [vmem:[#allocation2 + $0x18] sm:$0xff]
    %v25 = vlaneseq
    %v26 = vand.u32 %v25, 127
    %v27 = vadd.s32 %v26, 128
    %v28 = vadd.s32 %v26, 256
    %v29 = vadd.s32 %v26, 384
    %v30 = vand.u32 %v26, 1
    %v31 = vand.u32 %v27, 1
    %v32 = vand.u32 %v28, 1
    %v33 = vand.u32 %v29, 1
    %v34 = vmul.u32 %v30, 2
    %v35 = vmul.u32 %v31, 2
    %v36 = vmul.u32 %v32, 2
    %v37 = vmul.u32 %v33, 2
    %v38 = vsub.s32 1, %v34
    %v39 = vsub.s32 1, %v35
    %v40 = vsub.s32 1, %v36
    %v41 = vsub.s32 1, %v37
    %v42 = vcvt.s32.f32 %v38
    %v43 = vcvt.s32.f32 %v39
    %v44 = vcvt.s32.f32 %v40
    %v45 = vcvt.s32.f32 %v41
    %v46 = vmul.f32 %v21, %v42
    %v47 = vmul.f32 %v22, %v43
    %v48 = vmul.f32 %v23, %v44
    %v49 = vmul.f32 %v24, %v45
    %v50 = vmax.f32 %v46, 0.0
    %v51 = vmax.f32 %v47, 0.0
    %v52 = vmax.f32 %v48, 0.0
    %v53 = vmax.f32 %v49, 0.0
    %v54 = vmul.f32 %v50, %v42
    %v55 = vmul.f32 %v51, %v43
    %v56 = vmul.f32 %v52, %v44
    %v57 = vmul.f32 %v53, %v45
    %58 = vst [vmem:[#allocation5] sm:$0xff] %v54
    %59 = vst [vmem:[#allocation5 + $0x8] sm:$0xff] %v55
    %60 = vst [vmem:[#allocation5 + $0x10] sm:$0xff] %v56
    %61 = vst [vmem:[#allocation5 + $0x18] sm:$0xff] %v57
    // Predicated region
    $region10: #{tpu_custom_call.1} parent=1 // pred_check
      _
    $region11: #{tpu_custom_call.1} parent=1 // pred_check_branch
      %63 = sbr.rel (0) target = $region13
    $region12: #{tpu_custom_call.1} parent=1 // pred_region
      %s65 = ssub.s32 512, 512
      %66 = vsyncadd [#allocation4], %s65
      %s68 = sshll.u32 [#allocation5], 4
      %s69 = int_to_ptr.vmem [resolvable:$true] %s68
      %71 = dma.vmem_to_hbm [thread:$0]  %s69, 512, %s1, [#allocation4]
    $region13: #{tpu_custom_call.1} parent=1 // pred_fallthru
      _
    // Predicated region
    $region14: #{tpu_custom_call.1} parent=1 // pred_check
      _
    $region15: #{tpu_custom_call.1} parent=1 // pred_check_branch
      %73 = sbr.rel (0) target = $region17
    $region16: #{tpu_custom_call.1} parent=1 // pred_region
      %74 = dma.done [#allocation4], 512
    $region17: #{tpu_custom_call.1} parent=1 // pred_fallthru
      _
    %75 = vsyncpa [#allocation3], 1
    %76 = vsyncpa [#allocation4], 1

</llo_original>
